<compile_context>
chip_gen: v7x
topology: tpu7x:2x2x1
jax: 0.10.0
libtpu: 0.0.40
codegen_flags: <defaults>
</compile_context>

<pallas_src>
import jax
import jax.numpy as jnp
from jax import lax
from jax.experimental import pallas as pl
from jax.experimental.pallas import tpu as pltpu


def _round_up(x, m):
    return (x + m - 1) // m * m


# ----------------------------- Pallas kernel --------------------------------
def _fused_embed_kernel(ids_ref, ptable_ref, o_ref):
    """out[m] = proj_table[ids[m]] via a one-hot MXU matmul.

    ids_ref   : (tm, 1)  int32  token ids into combined projected table
    ptable_ref: (2V, D)  f32    pre-projected [bio; chem] table (VMEM resident)
    o_ref     : (tm, D)         gathered rows (already = emb @ W + b)
    """
    tm = ids_ref.shape[0]
    v2 = ptable_ref.shape[0]
    # Small-vocab gather on the MXU: (tm, 2V) x (2V, D).  One-hot rows select
    # exact table rows, so f32 x f32 with f32 accumulation is (near-)exact.
    iota = lax.broadcasted_iota(jnp.int32, (tm, v2), 1)
    onehot = (ids_ref[...] == iota).astype(jnp.float32)
    o_ref[...] = jnp.dot(onehot, ptable_ref[...],
                         preferred_element_type=jnp.float32).astype(o_ref.dtype)


def fused_embedding_lookup(flat_ids, proj_table, *, tm=1024, out_dtype=jnp.float32):
    """out[m] = proj_table[flat_ids[m]], fused in one Pallas TPU kernel.

    flat_ids:   (M,) int32 indices into `proj_table` (chem ids already offset)
    proj_table: (2V, D) f32 pre-projected table (= embed_table @ W + b)
    Returns:    (M, D) `out_dtype`
    """
    M = flat_ids.shape[0]
    V2, D = proj_table.shape

    # Tile selection: single block for tiny M; otherwise an even number of >=2
    # steps (sharded across v7x's two TensorCores via "parallel"), each a
    # multiple of 8 rows, capped at `tm`.
    if M <= 16:
        tm_eff = _round_up(M, 8)
    else:
        n_steps = pl.cdiv(M, tm)
        n_steps = n_steps + (n_steps % 2)          # make even (>= 2)
        tm_eff = min(tm, _round_up(pl.cdiv(M, n_steps), 8))
    grid = pl.cdiv(M, tm_eff)

    # Clamp instead of silently producing a zero row for OOB ids.
    ids2d = jnp.clip(flat_ids.astype(jnp.int32), 0, V2 - 1).reshape(M, 1)

    flops = 2 * M * V2 * D
    bytes_accessed = (4 * M                               # ids
                      + 4 * V2 * D                        # projected table (f32)
                      + jnp.dtype(out_dtype).itemsize * M * D)  # output

    out = pl.pallas_call(
        _fused_embed_kernel,
        out_shape=jax.ShapeDtypeStruct((M, D), out_dtype),
        grid_spec=pltpu.PrefetchScalarGridSpec(
            num_scalar_prefetch=0,
            grid=(grid,),
            in_specs=[
                pl.BlockSpec((tm_eff, 1), lambda i: (i, 0)),
                pl.BlockSpec((V2, D), lambda i: (0, 0)),
            ],
            out_specs=pl.BlockSpec((tm_eff, D), lambda i: (i, 0)),
        ),
        compiler_params=pltpu.CompilerParams(
            dimension_semantics=("parallel",)),
        cost_estimate=pl.CostEstimate(
            flops=flops, transcendentals=0, bytes_accessed=bytes_accessed),
    )(ids2d, proj_table)
    return out


# --------------------------- BioChemEmbedding -------------------------------
class BioChemEmbeddingJax:
    """JAX/Pallas re-implementation of BioChemEmbedding.forward ("concat" mode,
    bio_dim == chem_dim == projection_dim so only final_projection applies)."""

    def __init__(self, key, *, vocab_size=64, projection_dim=128):
        self.vocab_size = vocab_size
        self.projection_dim = projection_dim
        k1, k2, k3, k4 = jax.random.split(key, 4)
        # TODO(synk): stand-ins for the frozen pretrained Bio_ClinicalBERT /
        # ChemBERTa encoders; the transformer stacks are not replicated here.
        bio_table = jax.random.normal(
            k1, (vocab_size, projection_dim), jnp.float32) * 0.02
        chem_table = jax.random.normal(
            k2, (vocab_size, projection_dim), jnp.float32) * 0.02
        # Combined [bio; chem] table (chem ids offset by vocab_size).  Stored in
        # bf16 to mimic frozen encoder-output precision.
        self.embed_table = jnp.concatenate(
            [bio_table, chem_table], axis=0).astype(jnp.bfloat16)
        # final_projection = nn.Linear(D, D); stored as (in, out) == weight.T.
        bound = 1.0 / (projection_dim ** 0.5)
        self.final_w = jax.random.uniform(
            k3, (projection_dim, projection_dim), jnp.float32,
            -bound, bound).astype(jnp.bfloat16)
        self.final_b = jax.random.uniform(
            k4, (projection_dim,), jnp.float32, -bound, bound)
        # Everything is frozen, so fold the projection into the table ONCE at
        # init (f32, so the fold is bit-identical to f32-accumulate + bias).
        self.proj_table = (
            self.embed_table.astype(jnp.float32) @ self.final_w.astype(jnp.float32)
            + self.final_b[None, :]
        ).astype(jnp.float32)

    def __call__(self, adr_input_ids, adr_attention_mask,
                 smiles_input_ids, smiles_attention_mask):
        batch_size = adr_input_ids.shape[0]
        # embedding_combination == "concat"
        combined_attention_mask = jnp.concatenate(
            [adr_attention_mask, smiles_attention_mask], axis=1)          # [B, 2S]
        # Only int32 ids are built outside the kernel; the [B, 2S, D]
        # activations never round-trip through HBM before projection.
        combined_ids = jnp.concatenate(
            [adr_input_ids, smiles_input_ids + self.vocab_size], axis=1)  # [B, 2S]
        seq_len = combined_ids.shape[1]
        flat = fused_embedding_lookup(
            combined_ids.reshape(-1), self.proj_table,
            out_dtype=jnp.float32)                                        # Pallas
        combined_embeddings = flat.reshape(batch_size, seq_len, self.projection_dim)
        return combined_embeddings, combined_attention_mask


# --------------------------------- main --------------------------------------
if __name__ == "__main__":
    key = jax.random.PRNGKey(0)
    k_model, k_adr, k_smi = jax.random.split(key, 3)

    batch, adr_len, smiles_len, vocab, proj_dim = 2, 8, 8, 64, 128

    model = BioChemEmbeddingJax(k_model, vocab_size=vocab, projection_dim=proj_dim)

    adr_input_ids = jax.random.randint(k_adr, (batch, adr_len), 0, vocab, jnp.int32)
    smiles_input_ids = jax.random.randint(k_smi, (batch, smiles_len), 0, vocab, jnp.int32)
    adr_attention_mask = jnp.ones((batch, adr_len), jnp.int32)
    smiles_attention_mask = jnp.ones((batch, smiles_len), jnp.int32)

    combined_emb, combined_mask = model(
        adr_input_ids, adr_attention_mask, smiles_input_ids, smiles_attention_mask)
    combined_emb = jax.block_until_ready(combined_emb)
    combined_mask = jax.block_until_ready(combined_mask)

    # Pure-JAX reference (same bf16-quantized params, f32 math, unfused).
    ids = jnp.concatenate(
        [adr_input_ids, smiles_input_ids + vocab], axis=1).reshape(-1)
    table_f32 = model.embed_table.astype(jnp.float32)
    w_f32 = model.final_w.astype(jnp.float32)
    ref = jnp.take(table_f32, ids, axis=0) @ w_f32 + model.final_b
    ref = ref.reshape(batch, adr_len + smiles_len, proj_dim)

    assert combined_emb.shape == (batch, adr_len + smiles_len, proj_dim)
    assert combined_mask.shape == (batch, adr_len + smiles_len)
    max_err = float(jnp.max(jnp.abs(combined_emb - ref)))
    assert jnp.allclose(combined_emb, ref, atol=1e-2, rtol=1e-2), max_err

    print("KERNEL_OK")
</pallas_src>

<mosaic_0001>
module attributes {stable_mosaic.version = 11 : i64} {
  func.func @_fused_embed_kernel(%arg0: i32, %arg1: memref<16x1xi32, #tpu.memory_space<vmem>>, %arg2: memref<128x128xf32, #tpu.memory_space<vmem>>, %arg3: memref<16x128xf32, #tpu.memory_space<vmem>>) attributes {dimension_semantics = [#tpu.dimension_semantics<parallel>], iteration_bounds = array<i64: 2>, scalar_prefetch = 0 : i64, scratch_operands = 0 : i64, tpu.core_type = #tpu.core_type<tc>, window_params = [{transform_indices = @transform_0, window_bounds = array<i64: 16, 1>}, {pipeline_mode = #tpu.pipeline_mode<synchronous>, transform_indices = @transform_1, window_bounds = array<i64: 128, 128>}, {transform_indices = @transform_2, window_bounds = array<i64: 16, 128>}]} {
    %0 = tpu.iota {dimensions = array<i32: 1>} : vector<16x128xi32>
    %c0 = arith.constant 0 : index
    %c0_0 = arith.constant 0 : index
    %1 = vector.load %arg1[%c0, %c0_0] : memref<16x1xi32, #tpu.memory_space<vmem>>, vector<16x1xi32>
    %2 = vector.broadcast %1 : vector<16x1xi32> to vector<16x128xi32>
    %3 = arith.cmpi eq, %2, %0 : vector<16x128xi32>
    %4 = arith.extui %3 : vector<16x128xi1> to vector<16x128xi32>
    %5 = arith.sitofp %4 : vector<16x128xi32> to vector<16x128xf32>
    %c0_1 = arith.constant 0 : index
    %c0_2 = arith.constant 0 : index
    %6 = vector.load %arg2[%c0_1, %c0_2] : memref<128x128xf32, #tpu.memory_space<vmem>>, vector<128x128xf32>
    %cst = arith.constant dense<0.000000e+00> : vector<16x128xf32>
    %7 = tpu.matmul %5, %6, %cst {dimension_numbers = #tpu.dot_dimension_numbers<[1], [0], [0], [1], [0, 0, 1, 1], [], []>} : vector<16x128xf32>, vector<128x128xf32>, vector<16x128xf32> -> vector<16x128xf32>
    %c0_3 = arith.constant 0 : index
    %c0_4 = arith.constant 0 : index
    %8 = vector.load %arg3[%c0_3, %c0_4] : memref<16x128xf32, #tpu.memory_space<vmem>>, vector<16x128xf32>
    tpu.vector_store %arg3[%c0_3, %c0_4], %7 {strides = array<i32>} : memref<16x128xf32, #tpu.memory_space<vmem>>, vector<16x128xf32>,
    return
  }
  func.func @transform_0(%arg0: i32) -> (i32, i32) {
    %c0_i32 = arith.constant 0 : i32
    %c0_i32_0 = arith.constant 0 : i32
    return %arg0, %c0_i32 : i32, i32
  }
  func.func @transform_1(%arg0: i32) -> (i32, i32) {
    %c0_i32 = arith.constant 0 : i32
    %c0_i32_0 = arith.constant 0 : i32
    %c0_i32_1 = arith.constant 0 : i32
    return %c0_i32, %c0_i32_0 : i32, i32
  }
  func.func @transform_2(%arg0: i32) -> (i32, i32) {
    %c0_i32 = arith.constant 0 : i32
    %c0_i32_0 = arith.constant 0 : i32
    return %arg0, %c0_i32 : i32, i32
  }
}

</mosaic_0001>

<llo_original>
// kernel: tpu_custom_call.1
$region0: #{tpu_custom_call.1}
  #allocation0 [shape = 'u32[]', space=smem, size = 0x4, offset = 0x4, fixed_abs, tag = 'smem constant byte address 0x4 - core index']
  #allocation1 [shape = 'u32[144,128]{1,0:T(1,128)}', space=vmem, size = 0x12000, scoped, tag = 'internal scratch']
  %s0 = inlined_call_operand.vmem [shape: s32[32,1], index: 0, kind: input, shape index: {}]
  %s1 = inlined_call_operand.hbm [shape: f32[128,128], index: 1, kind: input, shape index: {}]
  %s2 = inlined_call_operand.hbm [shape: f32[32,128], index: 2, kind: output, shape index: {}]
  %s3 = sld [smem:[#allocation0]]
  $region45: #{tpu_custom_call.1} parent=0
    _
  %s5 = ssub.s32 1, %s3
  %s6 = scalar_select 0, %s5, %s3
  $region1: #{tpu_custom_call.1} parent=0
    #allocation2 [shape = 'u8[65536]{0}', space=vmem, size = 0x10000, scoped, tag = 'input window, operand 1, single buffered']
    #allocation3 [shape = 's32[2]{0}', space=sflag, size = 0x8, scoped, tag = 'scoped memory for tpu_custom_call.1']
    #allocation4 [shape = 's32[2]{0}', space=sflag, size = 0x8, scoped, tag = 'scoped memory for tpu_custom_call.1']
    #allocation5 [shape = 'u8[16384]{0}', space=vmem, size = 0x4000, scoped, tag = 'output window, operand 0']
    %7 = vsyncpa [#allocation3], 0
    %8 = vsyncpa [#allocation4], 0
    %s9 = scalar_lea.sflag [#allocation4], 1
    %10 = vsyncpa %s9, 0
    loop: start=0, step=1, limit=4
    $region2: #{tpu_custom_call.1} parent=1 // loop_pre_header
      _
    $region3: #{tpu_custom_call.1} parent=1 // loop_header
      %s12 = sphi 0, %s16
      %p13 = scmp.ge.s32.totalorder %s12, 4
      %s22 = sphi 0, %s24
      %s25 = sphi 0, %s22
      %s26 = sphi 0, %s25
      %s42 = sphi 0, %s26
      %s46 = sphi 0, %s46
      %s48 = sphi 0, %s46
      %s49 = sphi 0, %s48
      %s63 = sphi 0, %s49
      %s69 = sphi 0, %s71
      %s72 = sphi 0, %s69
      %s73 = sphi 0, %s72
      %s89 = sphi 0, %s73
    $region4: #{tpu_custom_call.1} parent=1 // loop_header_branch
      %15 = sbr.rel (%p13) target = $region8
    $region5: #{tpu_custom_call.1} parent=1 // loop_body
      %s17 = ssub.s32 %s12, 1
      %s18 = ssub.s32 %s12, 2
      %s19 = sadd.s32 %s12, 1
      %s20 = ssub.s32 %s12, %s19
      %p21 = scmp.eq.s32.totalorder %s20, 0
      %s23 = sadd.s32 %s22, 1
      %s24 = scalar_select %p21, %s22, %s23
      %p27 = pneg %p21
      %p28 = scmp.eq.s32.totalorder %s12, 1
      %p29 = por %p27, %p28
      %p30 = scmp.ne.s32.totalorder %s22, %s25
      %p31 = scmp.eq.s32.totalorder %s12, 0
      %p32 = por %p30, %p31
      %p33 = scmp.ne.s32.totalorder %s22, %s25
      %p34 = scmp.eq.s32.totalorder %s17, 1
      %p35 = por %p33, %p34
      %p36 = scmp.ne.s32.totalorder %s25, %s26
      %p37 = scmp.eq.s32.totalorder %s17, 0
      %p38 = por %p36, %p37
      %p39 = scmp.ne.s32.totalorder %s25, %s26
      %p40 = scmp.eq.s32.totalorder %s18, 1
      %p41 = por %p39, %p40
      %p43 = scmp.ne.s32.totalorder %s26, %s42
      %p44 = scmp.eq.s32.totalorder %s18, 0
      %p45 = por %p43, %p44
      %s47 = sadd.s32 %s46, 1
      %p50 = scmp.eq.s32.totalorder %s12, 1
      %p51 = scmp.ne.s32.totalorder %s46, %s48
      %p52 = scmp.eq.s32.totalorder %s12, 0
      %p53 = por %p51, %p52
      %p54 = scmp.ne.s32.totalorder %s46, %s48
      %p55 = scmp.eq.s32.totalorder %s17, 1
      %p56 = por %p54, %p55
      %p57 = scmp.ne.s32.totalorder %s48, %s49
      %p58 = scmp.eq.s32.totalorder %s17, 0
      %p59 = por %p57, %p58
      %p60 = scmp.ne.s32.totalorder %s48, %s49
      %p61 = scmp.eq.s32.totalorder %s18, 1
      %p62 = por %p60, %p61
      %p64 = scmp.ne.s32.totalorder %s49, %s63
      %p65 = scmp.eq.s32.totalorder %s18, 0
      %p66 = por %p64, %p65
      %s67 = ssub.s32 %s12, %s19
      %p68 = scmp.eq.s32.totalorder %s67, 0
      %s70 = sadd.s32 %s69, 1
      %s71 = scalar_select %p68, %s69, %s70
      %p74 = pneg %p68
      %p75 = scmp.eq.s32.totalorder %s12, 1
      %p76 = por %p74, %p75
      %p77 = scmp.ne.s32.totalorder %s69, %s72
      %p78 = scmp.eq.s32.totalorder %s12, 0
      %p79 = por %p77, %p78
      %p80 = scmp.ne.s32.totalorder %s69, %s72
      %p81 = scmp.eq.s32.totalorder %s17, 1
      %p82 = por %p80, %p81
      %p83 = scmp.ne.s32.totalorder %s72, %s73
      %p84 = scmp.eq.s32.totalorder %s17, 0
      %p85 = por %p83, %p84
      %p86 = scmp.ne.s32.totalorder %s72, %s73
      %p87 = scmp.eq.s32.totalorder %s18, 1
      %p88 = por %p86, %p87
      %p90 = scmp.ne.s32.totalorder %s73, %s89
      %p91 = scmp.eq.s32.totalorder %s18, 0
      %p92 = por %p90, %p91
      %p93 = scmp.le.s32.totalorder 1, %s12
      %p94 = scmp.lt.s32.totalorder %s12, 3
      %p95 = pnand %p93, %p94
      %p96 = pneg %p95
      // Predicated region
      $region9: #{tpu_custom_call.1} parent=5 // pred_check
        _
      $region10: #{tpu_custom_call.1} parent=5 // pred_check_branch
        %98 = sbr.rel (%p95) target = $region12
      $region11: #{tpu_custom_call.1} parent=5 // pred_region
        %s99 = ssub.s32 %s12, 1
        // Predicated region
        $region13: #{tpu_custom_call.1} parent=11 // pred_check
          %p100 = pneg %p59
        $region14: #{tpu_custom_call.1} parent=11 // pred_check_branch
          %102 = sbr.rel (%p100) target = $region16
        $region15: #{tpu_custom_call.1} parent=11 // pred_region
          %s104 = ssub.s32 2048, 2048
          %105 = vsyncadd [#allocation3], %s104
          %s106 = sshll.u32 [#allocation2], 4
          %s107 = int_to_ptr.vmem [resolvable:$true] %s106
          %112 = dma.hbm_to_vmem [thread:$0]  %s1, 2048, %s107, [#allocation3], 128, 128, 8
        $region16: #{tpu_custom_call.1} parent=11 // pred_fallthru
          _
      $region12: #{tpu_custom_call.1} parent=5 // pred_fallthru
        _
      %p113 = scmp.lt.s32.totalorder %s12, 2
      // Predicated region
      $region17: #{tpu_custom_call.1} parent=5 // pred_check
        %p114 = pneg %p113
      $region18: #{tpu_custom_call.1} parent=5 // pred_check_branch
        %116 = sbr.rel (%p114) target = $region20
      $region19: #{tpu_custom_call.1} parent=5 // pred_region
        // Predicated region
        $region21: #{tpu_custom_call.1} parent=19 // pred_check
          %p117 = pneg %p32
        $region22: #{tpu_custom_call.1} parent=19 // pred_check_branch
          %119 = sbr.rel (%p117) target = $region24
        $region23: #{tpu_custom_call.1} parent=19 // pred_region
          %s120 = smul.u32 2, %s12
          %p121 = scmp.lt.s32.totalorder %s120, 3
          %s122 = scalar_select %p121, %s120, 3
          %s123 = smul.addr %s122, 8
          %s124 = scalar_lea.vmem %s0, %s123
          %s125 = smul.u32 2, %s12
        $region24: #{tpu_custom_call.1} parent=19 // pred_fallthru
          _
      $region20: #{tpu_custom_call.1} parent=5 // pred_fallthru
        _
      %p126 = scmp.le.s32.totalorder 1, %s12
      %p127 = scmp.lt.s32.totalorder %s12, 3
      %p128 = pnand %p126, %p127
      %p129 = pneg %p128
      // Predicated region
      $region25: #{tpu_custom_call.1} parent=5 // pred_check
        _
      $region26: #{tpu_custom_call.1} parent=5 // pred_check_branch
        %131 = sbr.rel (%p128) target = $region28
      $region27: #{tpu_custom_call.1} parent=5 // pred_region
        %s132 = ssub.s32 %s12, 1
        // Predicated region
        $region29: #{tpu_custom_call.1} parent=27 // pred_check
          %p133 = pneg %p59
        $region30: #{tpu_custom_call.1} parent=27 // pred_check_branch
          %135 = sbr.rel (%p133) target = $region32
        $region31: #{tpu_custom_call.1} parent=27 // pred_region
          %136 = dma.done [#allocation3], 2048
        $region32: #{tpu_custom_call.1} parent=27 // pred_fallthru
          _
        %s137 = smul.u32 2, %s17
        %p138 = scmp.lt.s32.totalorder %s137, 3
        %s139 = scalar_select %p138, %s137, 3
        %s140 = smul.addr %s139, 8
        %s141 = scalar_lea.vmem %s0, %s140
        %p142 = pneg %p38
        %p143 = pneg %p35
        %p144 = pneg %p59
        %p145 = pneg %p56
        %p146 = pneg %p85
        %p147 = pneg %p82
        %s148 = sand.u32 %s72, 1
        %s149 = scalar_lea.sflag [#allocation4], %s148
        %s150 = sand.u32 %s72, 1
        %s151 = smul.addr %s150, 16
        %s152 = scalar_lea.vmem [#allocation5], %s151
        %s153 = smul.u32 2, %s17
        %p154 = scmp.lt.s32.totalorder %s153, 3
        %s155 = scalar_select %p154, %s153, 3
        %s156 = smul.addr %s155, 8
        %s157 = scalar_lea.vmem %s0, %s156
        %s158 = smul.u32 2, %s17
        %s159 = smul.u32 2, %s17
        %v160 = vlaneseq
        %v161 = vand.u32 %v160, 127
        %v162 = vld [vmem:[%s157] sm:$0xff]
        %v163 = vld [vmem:[%s157 + $0x8] sm:$0xff]
        %164 = vset.pattern.permute.xlu0 0
        %165 = vperm.xlu0 %164, %v162
        %v166 = vpop.permute.xlu0 %165
        %167 = vset.pattern.permute.xlu0 0
        %168 = vperm.xlu0 %167, %v163
        %v169 = vpop.permute.xlu0 %168
        %vm170 = vcmp.eq.s32.totalorder %v166, %v161
        %vm171 = vcmp.eq.s32.totalorder %v169, %v161
        %v172 = vsel %vm170, 1, 0
        %v173 = vsel %vm171, 1, 0
        %v174 = vcvt.s32.f32 %v172
        %v175 = vcvt.s32.f32 %v173
        %v176 = vld [vmem:[#allocation2] sm:$0xff]
        %v177 = vld [vmem:[#allocation2 + $0x8] sm:$0xff]
        %v178 = vld [vmem:[#allocation2 + $0x10] sm:$0xff]
        %v179 = vld [vmem:[#allocation2 + $0x18] sm:$0xff]
        %v180 = vld [vmem:[#allocation2 + $0x20] sm:$0xff]
        %v181 = vld [vmem:[#allocation2 + $0x28] sm:$0xff]
        %v182 = vld [vmem:[#allocation2 + $0x30] sm:$0xff]
        %v183 = vld [vmem:[#allocation2 + $0x38] sm:$0xff]
        %v184 = vld [vmem:[#allocation2 + $0x40] sm:$0xff]
        %v185 = vld [vmem:[#allocation2 + $0x48] sm:$0xff]
        %v186 = vld [vmem:[#allocation2 + $0x50] sm:$0xff]
        %v187 = vld [vmem:[#allocation2 + $0x58] sm:$0xff]
        %v188 = vld [vmem:[#allocation2 + $0x60] sm:$0xff]
        %v189 = vld [vmem:[#allocation2 + $0x68] sm:$0xff]
        %v190 = vld [vmem:[#allocation2 + $0x70] sm:$0xff]
        %v191 = vld [vmem:[#allocation2 + $0x78] sm:$0xff]
        %192 = vmatprep.subr.mxu0 0.0
        %193 = vmatpush1.msra.mxu0 %v176
        %194 = vmatprep.subr.mxu0 0.0
        %195 = vmatpush1.msra.mxu0 %v177
        %196 = vmatprep.subr.mxu0 0.0
        %197 = vmatpush1.msra.mxu0 %v178
        %198 = vmatprep.subr.mxu0 0.0
        %199 = vmatpush1.msra.mxu0 %v179
        %200 = vmatprep.subr.mxu0 0.0
        %201 = vmatpush1.msra.mxu0 %v180
        %202 = vmatprep.subr.mxu0 0.0
        %203 = vmatpush1.msra.mxu0 %v181
        %204 = vmatprep.subr.mxu0 0.0
        %205 = vmatpush1.msra.mxu0 %v182
        %206 = vmatprep.subr.mxu0 0.0
        %207 = vmatpush1.msra.mxu0 %v183
        %208 = vmatprep.subr.mxu0 0.0
        %209 = vmatpush1.msra.mxu0 %v184
        %210 = vmatprep.subr.mxu0 0.0
        %211 = vmatpush1.msra.mxu0 %v185
        %212 = vmatprep.subr.mxu0 0.0
        %213 = vmatpush1.msra.mxu0 %v186
        %214 = vmatprep.subr.mxu0 0.0
        %215 = vmatpush1.msra.mxu0 %v187
        %216 = vmatprep.subr.mxu0 0.0
        %217 = vmatpush1.msra.mxu0 %v188
        %218 = vmatprep.subr.mxu0 0.0
        %219 = vmatpush1.msra.mxu0 %v189
        %220 = vmatprep.subr.mxu0 0.0
        %221 = vmatpush1.msra.mxu0 %v190
        %222 = vmatprep.subr.mxu0 0.0
        %223 = vmatpush1.msra.mxu0 %v191
        %224 = vmatprep.subr.mxu0 0.0
        %225 = vmatpush1.msra.mxu0 0.0
        %226 = vmatprep.subr.mxu0 0.0
        %227 = vmatpush1.msra.mxu0 0.0
        %228 = vmatprep.subr.mxu0 0.0
        %229 = vmatpush1.msra.mxu0 0.0
        %230 = vmatprep.subr.mxu0 0.0
        %231 = vmatpush1.msra.mxu0 0.0
        %232 = vmatprep.subr.mxu0 0.0
        %233 = vmatpush1.msra.mxu0 0.0
        %234 = vmatprep.subr.mxu0 0.0
        %235 = vmatpush1.msra.mxu0 0.0
        %236 = vmatprep.subr.mxu0 0.0
        %237 = vmatpush1.msra.mxu0 0.0
        %238 = vmatprep.subr.mxu0 0.0
        %239 = vmatpush1.msra.mxu0 0.0
        %240 = vmatprep.subr.mxu0 0.0
        %241 = vmatpush1.msra.mxu0 0.0
        %242 = vmatprep.subr.mxu0 0.0
        %243 = vmatpush1.msra.mxu0 0.0
        %244 = vmatprep.subr.mxu0 0.0
        %245 = vmatpush1.msra.mxu0 0.0
        %246 = vmatprep.subr.mxu0 0.0
        %247 = vmatpush1.msra.mxu0 0.0
        %248 = vmatprep.subr.mxu0 0.0
        %249 = vmatpush1.msra.mxu0 0.0
        %250 = vmatprep.subr.mxu0 0.0
        %251 = vmatpush1.msra.mxu0 0.0
        %252 = vmatprep.subr.mxu0 0.0
        %253 = vmatpush1.msra.mxu0 0.0
        %254 = vmatprep.subr.mxu0 0.0
        %255 = vmatpush1.msra.mxu0 0.0
        %256 = vmatprep.mubr.f32.mxu0 0.0
        %257 = vmatmul.mubr.f32.gmra.mrb[0].mxu0 %v174
        %v258 = vpop.f32.mrb[0].mxu0
        %v259 = vadd.f32 0.0, %v258
        %v260 = vpop.f32.mrb[0].mxu0
        %261 = vmatprep.mubr.f32.mxu0 0.0
        %262 = vmatmul.mubr.f32.gmra.mrb[0].mxu0 %v175
        %v263 = vpop.f32.mrb[0].mxu0
        %v264 = vadd.f32 0.0, %v263
        %v265 = vpop.f32.mrb[0].mxu0
        %266 = vdwg.mxu0
        %267 = vst [vmem:[%s152] sm:$0xff] %v259
        %268 = vst [vmem:[%s152 + $0x8] sm:$0xff] %v264
        %s269 = sand.u32 %s72, 1
        %s270 = scalar_lea.sflag [#allocation4], %s269
        %s271 = sand.u32 %s72, 1
        %s272 = smul.addr %s271, 16
        %s273 = scalar_lea.vmem [#allocation5], %s272
        // Predicated region
        $region33: #{tpu_custom_call.1} parent=27 // pred_check
          %p274 = pneg %p82
        $region34: #{tpu_custom_call.1} parent=27 // pred_check_branch
          %276 = sbr.rel (%p274) target = $region36
        $region35: #{tpu_custom_call.1} parent=27 // pred_region
          %s277 = smul.u32 2, %s17
          %s279 = ssub.s32 256, 256
          %280 = vsyncadd %s270, %s279
          %s281 = smul.addr %s277, 128
          %s282 = scalar_lea.hbm %s2, %s281
          %s283 = sshll.u32 %s273, 4
          %s284 = int_to_ptr.vmem [resolvable:$true] %s283
          %289 = dma.vmem_to_hbm [thread:$0]  %s284, 256, %s282, %s270, 128, 128, 8
        $region36: #{tpu_custom_call.1} parent=27 // pred_fallthru
          _
      $region28: #{tpu_custom_call.1} parent=5 // pred_fallthru
        _
      %p290 = scmp.le.s32.totalorder 2, %s12
      // Predicated region
      $region37: #{tpu_custom_call.1} parent=5 // pred_check
        %p291 = pneg %p290
      $region38: #{tpu_custom_call.1} parent=5 // pred_check_branch
        %293 = sbr.rel (%p291) target = $region40
      $region39: #{tpu_custom_call.1} parent=5 // pred_region
        %s294 = ssub.s32 %s12, 2
        // Predicated region
        $region41: #{tpu_custom_call.1} parent=39 // pred_check
          %p295 = pneg %p88
        $region42: #{tpu_custom_call.1} parent=39 // pred_check_branch
          %297 = sbr.rel (%p295) target = $region44
        $region43: #{tpu_custom_call.1} parent=39 // pred_region
          %s298 = sand.u32 %s73, 1
          %s299 = scalar_lea.sflag [#allocation4], %s298
          %s300 = sand.u32 %s73, 1
          %s301 = smul.addr %s300, 16
          %s302 = scalar_lea.vmem [#allocation5], %s301
          %303 = dma.done %s299, 256
        $region44: #{tpu_custom_call.1} parent=39 // pred_fallthru
          _
      $region40: #{tpu_custom_call.1} parent=5 // pred_fallthru
        _
    $region6: #{tpu_custom_call.1} parent=1 // loop_footer
      %s16 = sadd.s32 1, %s12
    $region7: #{tpu_custom_call.1} parent=1 // loop_footer_branch
      %11 = sbr.rel target = $region3
    $region8: #{tpu_custom_call.1} parent=1 // loop_exit
      _
    %304 = vsyncpa [#allocation3], 1
    %s305 = scalar_lea.sflag [#allocation3], 1
    %306 = vsyncpa %s305, 1
    %307 = vsyncpa [#allocation4], 1
    %s308 = scalar_lea.sflag [#allocation4], 1
    %309 = vsyncpa %s308, 1

</llo_original>
